<compile_context>
chip_gen: v7x
topology: tpu7x:2x2x1
jax: 0.10.0
libtpu: 0.0.40
codegen_flags: <defaults>
</compile_context>

<pallas_src>
import functools

import numpy as np
import jax
import jax.numpy as jnp
from jax.experimental import pallas as pl
from jax.experimental.pallas import tpu as pltpu


# ---------------------------------------------------------------------------
# Pallas kernels (grid-less, whole-array VMEM blocks)
# ---------------------------------------------------------------------------
def _tune_kernel(lar_ref, logvar_ref, logvar_out_ref, step_out_ref, *,
                 log_inc2, target, min_lv, max_lv):
    # Log-space formulation of:
    #   step = exp(0.5*logvar); step /= or *= tune_inc; clip; logvar = 2*log(step)
    # plus the fused step_size = exp(0.5*new_logvar) output.
    mean_accept = jnp.mean(jnp.exp(lar_ref[...]))
    delta = jnp.where(mean_accept < target, -log_inc2, log_inc2)
    new_logvar = jnp.clip(logvar_ref[...] + delta, min_lv, max_lv)
    logvar_out_ref[...] = new_logvar
    step_out_ref[...] = jnp.exp(0.5 * new_logvar)


def _grad_std_tune_kernel(lar_ref, step_ref, gstd_ref, gamma_ref,
                          step_out_ref, logvar_out_ref, gamma_out_ref, *,
                          tune_inc, target):
    # Linear-space: new_step = 0.9*step + 0.1*gamma_0/(grad_std + 1)
    # logvar kept in sync (single EUP log); gamma_0 updated on-device.
    gamma = gamma_ref[...]                                        # (1, 1)
    new_step = 0.9 * step_ref[...] + (0.1 * gamma) / (gstd_ref[...] + 1.0)
    step_out_ref[...] = new_step
    logvar_out_ref[...] = 2.0 * jnp.log(new_step)

    mean_accept = jnp.mean(jnp.exp(lar_ref[...]))
    gamma_out_ref[...] = jnp.where(mean_accept < target,
                                   gamma / tune_inc, gamma * tune_inc)
    # TODO(synk): gamma_0 could live in SMEM (pltpu.MemorySpace.SMEM) to skip a
    # padded (8,128) VMEM tile; kept in VMEM here for lowering robustness.


_VMEM_SPEC = pl.BlockSpec(memory_space=pltpu.MemorySpace.VMEM)


# ---------------------------------------------------------------------------
# Pallas wrappers (jitted; in-place aliased + donated state)
# ---------------------------------------------------------------------------
@functools.partial(
    jax.jit,
    static_argnames=("tune_inc", "target_accept_ratio",
                     "min_step_size", "max_step_size"),
    donate_argnums=(1,))
def pallas_tune_logvar(log_accept_ratio, logvar, *, tune_inc,
                       target_accept_ratio, min_step_size, max_step_size):
    # Keep the donated state arg (logvar) untouched so the alias/donation holds.
    lar = jnp.atleast_2d(jnp.asarray(log_accept_ratio, dtype=jnp.float32))
    kernel = functools.partial(
        _tune_kernel,
        log_inc2=float(2.0 * np.log(tune_inc)),
        target=float(target_accept_ratio),
        min_lv=float(2.0 * np.log(min_step_size)),
        max_lv=float(2.0 * np.log(max_step_size)),
    )
    new_logvar, new_step = pl.pallas_call(
        kernel,
        out_shape=(jax.ShapeDtypeStruct(logvar.shape, logvar.dtype),
                   jax.ShapeDtypeStruct(logvar.shape, logvar.dtype)),
        in_specs=[_VMEM_SPEC, _VMEM_SPEC],
        out_specs=(_VMEM_SPEC, _VMEM_SPEC),
        input_output_aliases={1: 0},       # logvar updated in place
    )(lar, logvar)
    return new_logvar, new_step


@functools.partial(
    jax.jit,
    static_argnames=("tune_inc", "target_accept_ratio"),
    donate_argnums=(1, 3))
def pallas_grad_std_tune(log_accept_ratio, step_size, grad_std, gamma_0, *,
                         tune_inc, target_accept_ratio):
    lar = jnp.atleast_2d(jnp.asarray(log_accept_ratio, dtype=jnp.float32))
    gstd = jnp.reshape(jnp.asarray(grad_std, dtype=jnp.float32), step_size.shape)
    kernel = functools.partial(
        _grad_std_tune_kernel,
        tune_inc=float(tune_inc),
        target=float(target_accept_ratio),
    )
    new_step, new_logvar, new_gamma = pl.pallas_call(
        kernel,
        out_shape=(jax.ShapeDtypeStruct(step_size.shape, step_size.dtype),
                   jax.ShapeDtypeStruct(step_size.shape, step_size.dtype),
                   jax.ShapeDtypeStruct((1, 1), jnp.float32)),
        in_specs=[_VMEM_SPEC, _VMEM_SPEC, _VMEM_SPEC, _VMEM_SPEC],
        out_specs=(_VMEM_SPEC, _VMEM_SPEC, _VMEM_SPEC),
        input_output_aliases={1: 0, 3: 2},  # step_size, gamma_0 updated in place
    )(lar, step_size, gstd, gamma_0)
    return new_step, new_logvar, new_gamma


# ---------------------------------------------------------------------------
# BaseTransition in JAX (parameters held as jnp arrays)
# ---------------------------------------------------------------------------
def logger_dict_update(**kwargs):
    logger_dict = {}
    for k, v in kwargs.items():
        if v is not None:
            logger_dict[k] = jnp.asarray(v)  # JAX arrays are immutable (≡ clone().detach())
    return logger_dict


class BaseTransitionPallas:
    """JAX/Pallas port of sampling.transitions.BaseTransition."""

    def __init__(self, input_dim, step_size=0.1, update='fixed', n_tune=10,
                 tune_inc=1.1, target_accept_ratio=0.8, min_step_size=0.001,
                 max_step_size=1.0, gamma_0=0.1, name='Markov'):
        self.name = name
        self.input_dim = input_dim
        self.update = update
        self.n_tune = n_tune
        self.tune_inc = float(tune_inc)
        self.min_step_size = float(min_step_size)
        self.max_step_size = float(max_step_size)
        # gamma_0 stays device-resident (no host sync in the tune loop).
        self.gamma_0 = jnp.full((1, 1), float(gamma_0), dtype=jnp.float32)
        # NOTE: torch code hard-codes 0.8 regardless of the constructor arg.
        self.target_accept_ratio = 0.8
        # logvar = 2*log(step_size), shape (1, input_dim), float32.
        # step_size is kept in lockstep so the property never launches a kernel.
        # TODO(synk): 'learn' in torch registers logvar as a trainable nn.Parameter;
        # here it is just an array (no autograd bookkeeping).
        self.logvar = jnp.full((1, input_dim), 2.0 * np.log(step_size),
                               dtype=jnp.float32)
        self._step_size = jnp.full((1, input_dim), float(step_size),
                                   dtype=jnp.float32)

    @property
    def step_size(self):
        # Cached; updated in lockstep with logvar by __init__ and the fused
        # tune kernels (no extra kernel launch).
        return self._step_size

    def tune_step_size(self, a=None, log_accept_ratio=None, grad_std=None):
        if self.update == 'tune':
            self.logvar, self._step_size = pallas_tune_logvar(
                log_accept_ratio, self.logvar,
                tune_inc=self.tune_inc,
                target_accept_ratio=self.target_accept_ratio,
                min_step_size=self.min_step_size,
                max_step_size=self.max_step_size)
        elif self.update == 'grad-std-tune':
            # One fused kernel: new step_size (linear space), synced logvar and
            # gamma_0 (with the pre-update gamma_0, as in the torch reference),
            # all on device, state aliased in place.
            self._step_size, self.logvar, self.gamma_0 = pallas_grad_std_tune(
                log_accept_ratio, self._step_size, grad_std, self.gamma_0,
                tune_inc=self.tune_inc,
                target_accept_ratio=self.target_accept_ratio)
        # 'fixed' / 'learn': torch's trailing logvar = 2*log(step_size) is a
        # no-op for those modes, so no change here either.

    def step(self, z, log_w, target_log_density, beta):
        # TODO(synk): step() is abstract (`pass`) in the PyTorch base class; use an
        # identity pass-through with zero incremental weight so forward() is runnable.
        log_w_inc = jnp.zeros_like(log_w)
        logger_dict = {}
        return z, log_w, log_w_inc, logger_dict

    def forward(self, z, log_w, target_log_density, beta,
                update_step_size=False, n_samples=1):
        if update_step_size and (self.update == 'tune' or self.update == 'grad-std-tune'):
            # TODO(synk): concrete subclasses should fold this loop (and the tune
            # math itself) into the jitted step() kernel's epilogue; with the
            # abstract base step() there is nothing meaningful to fuse.
            for _ in range(self.n_tune):
                z_ = jnp.asarray(z)
                log_w_ = jnp.asarray(log_w)
                _, _, _, logger_dict = self.step(z_, log_w_, target_log_density, beta)
                self.tune_step_size(logger_dict.get('a'),
                                    logger_dict.get('log_accept_ratio'),
                                    logger_dict.get('grad_std'))
        z, log_w, log_w_inc, logger_dict = self.step(z, log_w, target_log_density, beta)
        logger_dict = logger_dict_update(
            z=z.reshape(z.shape + (1,)), log_w=log_w, **logger_dict)
        return z, log_w, log_w_inc, logger_dict

    __call__ = forward


# ---------------------------------------------------------------------------
# Demo
# ---------------------------------------------------------------------------
if __name__ == "__main__":
    key = jax.random.PRNGKey(0)
    N, D = 8, 32  # n_samples, input_dim

    k1, k2, k3 = jax.random.split(key, 3)
    z = jax.random.normal(k1, (N, D), dtype=jnp.float32)
    log_w = jnp.zeros((N,), dtype=jnp.float32)
    beta = 1.0

    def target_log_density(x):  # standard normal, unused by the abstract base step
        return -0.5 * jnp.sum(x * x, axis=-1)

    # --- forward pass (update='fixed', no tuning loop) ---
    model = BaseTransitionPallas(D, step_size=0.1, update='fixed')
    z_out, log_w_out, log_w_inc, logger = model(z, log_w, target_log_density, beta)
    jax.block_until_ready((z_out, log_w_out, log_w_inc, logger['z'], logger['log_w']))

    # --- step_size property (cached, lockstep with logvar; zero launches) ---
    ss = jax.block_until_ready(model.step_size)
    np.testing.assert_allclose(np.asarray(ss),
                               np.exp(0.5 * np.asarray(model.logvar)),
                               rtol=1e-6)

    # --- tune_step_size with 'tune' update (log-space Pallas kernel, fused step) ---
    tune_model = BaseTransitionPallas(D, step_size=0.1, update='tune')
    log_accept_ratio = -jnp.abs(jax.random.normal(k2, (N, 1), dtype=jnp.float32))
    tune_model.tune_step_size(log_accept_ratio=log_accept_ratio)
    ss_tuned = jax.block_until_ready(tune_model.step_size)
    lv_tuned = jax.block_until_ready(tune_model.logvar)
    # reference check (linear-space torch semantics)
    mean_acc = float(np.mean(np.exp(np.asarray(log_accept_ratio))))
    ref = 0.1 / 1.1 if mean_acc < 0.8 else 0.1 * 1.1
    ref = float(np.clip(ref, 0.001, 1.0))
    np.testing.assert_allclose(np.asarray(ss_tuned), np.full((1, D), ref), rtol=1e-4)
    np.testing.assert_allclose(np.asarray(lv_tuned),
                               np.full((1, D), 2.0 * np.log(ref)), rtol=1e-4)

    # --- tune_step_size with 'grad-std-tune' update (fused linear-space kernel) ---
    gst_model = BaseTransitionPallas(D, step_size=0.1, update='grad-std-tune')
    grad_std = jnp.abs(jax.random.normal(k3, (1, D), dtype=jnp.float32))
    gst_model.tune_step_size(log_accept_ratio=log_accept_ratio, grad_std=grad_std)
    ss_gst = jax.block_until_ready(gst_model.step_size)
    gamma_new = jax.block_until_ready(gst_model.gamma_0)
    ref_step = 0.9 * 0.1 + 0.1 * 0.1 / (np.asarray(grad_std) + 1.0)
    np.testing.assert_allclose(np.asarray(ss_gst), ref_step, rtol=1e-5)
    np.testing.assert_allclose(np.asarray(gst_model.logvar),
                               2.0 * np.log(ref_step), rtol=1e-5)
    ref_gamma = 0.1 / 1.1 if mean_acc < 0.8 else 0.1 * 1.1
    np.testing.assert_allclose(np.asarray(gamma_new), np.full((1, 1), ref_gamma),
                               rtol=1e-5)

    print("KERNEL_OK")
</pallas_src>

<mosaic_0001>
module attributes {stable_mosaic.version = 11 : i64} {
  func.func @_tune_kernel(%arg0: memref<8x1xf32, #tpu.memory_space<vmem>>, %arg1: memref<1x32xf32, #tpu.memory_space<vmem>>, %arg2: memref<1x32xf32, #tpu.memory_space<vmem>>, %arg3: memref<1x32xf32, #tpu.memory_space<vmem>>) attributes {dimension_semantics = [], scalar_prefetch = 0 : i64, scratch_operands = 0 : i64, tpu.core_type = #tpu.core_type<tc>} {
    %c0 = arith.constant 0 : index
    %c0_0 = arith.constant 0 : index
    %0 = vector.load %arg0[%c0, %c0_0] : memref<8x1xf32, #tpu.memory_space<vmem>>, vector<8x1xf32>
    %1 = math.exp %0 : vector<8x1xf32>
    %2 = vector.shape_cast %1 : vector<8x1xf32> to vector<1x8x1xf32>
    %cst = arith.constant dense<0.000000e+00> : vector<1xf32>
    %3 = vector.multi_reduction <add>, %2, %cst [1, 2] : vector<1x8x1xf32> to vector<1xf32>
    %4 = vector.shape_cast %3 : vector<1xf32> to vector<1x1x1xf32>
    %5 = vector.extract %4[0, 0, 0] : f32 from vector<1x1x1xf32>
    %cst_1 = arith.constant 8.000000e+00 : f32
    %6 = arith.divf %5, %cst_1 : f32
    %cst_2 = arith.constant 8.000000e-01 : f32
    %7 = arith.cmpf olt, %6, %cst_2 : f32
    %cst_3 = arith.constant -0.190620363 : f32
    %cst_4 = arith.constant 0.190620363 : f32
    %8 = arith.select %7, %cst_3, %cst_4 : f32
    %c0_5 = arith.constant 0 : index
    %c0_6 = arith.constant 0 : index
    %9 = vector.load %arg1[%c0_5, %c0_6] : memref<1x32xf32, #tpu.memory_space<vmem>>, vector<1x32xf32>
    %10 = vector.broadcast %8 : f32 to vector<1x32xf32>
    %11 = arith.addf %9, %10 : vector<1x32xf32>
    %cst_7 = arith.constant -13.8155107 : f32
    %cst_8 = arith.constant 0.000000e+00 : f32
    %12 = vector.broadcast %cst_7 : f32 to vector<1x32xf32>
    %13 = arith.maximumf %12, %11 : vector<1x32xf32>
    %14 = vector.broadcast %cst_8 : f32 to vector<1x32xf32>
    %15 = arith.minimumf %14, %13 : vector<1x32xf32>
    %c0_9 = arith.constant 0 : index
    %c0_10 = arith.constant 0 : index
    %16 = vector.load %arg2[%c0_9, %c0_10] : memref<1x32xf32, #tpu.memory_space<vmem>>, vector<1x32xf32>
    tpu.vector_store %arg2[%c0_9, %c0_10], %15 {strides = array<i32>} : memref<1x32xf32, #tpu.memory_space<vmem>>, vector<1x32xf32>,
    %cst_11 = arith.constant 5.000000e-01 : f32
    %17 = vector.broadcast %cst_11 : f32 to vector<1x32xf32>
    %18 = arith.mulf %17, %15 : vector<1x32xf32>
    %19 = math.exp %18 : vector<1x32xf32>
    %c0_12 = arith.constant 0 : index
    %c0_13 = arith.constant 0 : index
    %20 = vector.load %arg3[%c0_12, %c0_13] : memref<1x32xf32, #tpu.memory_space<vmem>>, vector<1x32xf32>
    tpu.vector_store %arg3[%c0_12, %c0_13], %19 {strides = array<i32>} : memref<1x32xf32, #tpu.memory_space<vmem>>, vector<1x32xf32>,
    return
  }
}

</mosaic_0001>

<llo_original>
// kernel: pallas_tune_logvar.1
$region0: #{pallas_tune_logvar.1}
  #allocation0 [shape = 'u32[]', space=smem, size = 0x4, offset = 0x4, fixed_abs, tag = 'smem constant byte address 0x4 - core index']
  #allocation1 [shape = 'u32[144,128]{1,0:T(1,128)}', space=vmem, size = 0x12000, scoped, tag = 'internal scratch']
  %s0 = inlined_call_operand.vmem [shape: f32[8,1], index: 0, kind: input, shape index: {}]
  %s1 = inlined_call_operand.hbm [shape: f32[1,32], index: 1, kind: input, shape index: {}, may-alias: {1,2}]
  %s2 = inlined_call_operand.hbm [shape: f32[1,32], index: 2, kind: output, shape index: {0}, may-alias: {1,2}]
  %s3 = inlined_call_operand.hbm [shape: f32[1,32], index: 3, kind: output, shape index: {1}]
  %4 = xla_tuple %s2, %s3
  %s5 = sld [smem:[#allocation0]]
  $region30: #{pallas_tune_logvar.1} parent=0
    _
  %s7 = ssub.s32 1, %s5
  %s8 = scalar_select 0, %s7, %s5
  $region1: #{pallas_tune_logvar.1} parent=0
    #allocation2 [shape = 'u8[512]{0}', space=vmem, size = 0x400, scoped, tag = 'input window, operand 1, single buffered']
    #allocation3 [shape = 's32[1]{0}', space=sflag, size = 0x4, scoped, tag = 'scoped memory for pallas_tune_logvar.1']
    #allocation4 [shape = 's32[1]{0}', space=sflag, size = 0x4, scoped, tag = 'scoped memory for pallas_tune_logvar.1']
    #allocation5 [shape = 'u8[512]{0}', space=vmem, size = 0x400, scoped, tag = 'output window, operand 0, single buffered']
    #allocation6 [shape = 'u8[512]{0}', space=vmem, size = 0x400, scoped, tag = 'output window, operand 1, single buffered']
    #allocation7 [shape = 's32[1]{0}', space=sflag, size = 0x4, scoped, tag = 'scoped memory for pallas_tune_logvar.1']
    %9 = vsyncpa [#allocation3], 0
    %10 = vsyncpa [#allocation4], 0
    %11 = vsyncpa [#allocation7], 0
    // Predicated region
    $region2: #{pallas_tune_logvar.1} parent=1 // pred_check
      _
    $region3: #{pallas_tune_logvar.1} parent=1 // pred_check_branch
      %13 = sbr.rel (0) target = $region5
    $region4: #{pallas_tune_logvar.1} parent=1 // pred_region
      _
    $region5: #{pallas_tune_logvar.1} parent=1 // pred_fallthru
      _
    // Predicated region
    $region6: #{pallas_tune_logvar.1} parent=1 // pred_check
      _
    $region7: #{pallas_tune_logvar.1} parent=1 // pred_check_branch
      %15 = sbr.rel (0) target = $region9
    $region8: #{pallas_tune_logvar.1} parent=1 // pred_region
      %s17 = ssub.s32 16, 16
      %18 = vsyncadd [#allocation3], %s17
      %s20 = sshll.u32 [#allocation2], 4
      %s21 = int_to_ptr.vmem [resolvable:$true] %s20
      %23 = dma.hbm_to_vmem [thread:$0]  %s1, 16, %s21, [#allocation3]
    $region9: #{pallas_tune_logvar.1} parent=1 // pred_fallthru
      _
    // Predicated region
    $region10: #{pallas_tune_logvar.1} parent=1 // pred_check
      _
    $region11: #{pallas_tune_logvar.1} parent=1 // pred_check_branch
      %25 = sbr.rel (0) target = $region13
    $region12: #{pallas_tune_logvar.1} parent=1 // pred_region
      %26 = dma.done [#allocation3], 16
    $region13: #{pallas_tune_logvar.1} parent=1 // pred_fallthru
      _
    %v27 = vld [vmem:[%s0] sm:$0xff]
    %v28 = vmul.f32 %v27, 1.442695
    %v29 = vpow.pop %v28
    %vm30 = vcmask 7168
    %v31 = vsel %vm30, %v29, 0.0
    %32 = vadd.xlane.f32.xlu0 %v31
    %v33 = vpop.xlane.xlu0 %32
    %v34 = vrot.slane %v33, 4
    %v35 = vadd.f32 %v33, %v34
    %v36 = vrot.slane %v35, 2
    %v37 = vadd.f32 %v35, %v36
    %v38 = vrot.slane %v37, 1
    %v39 = vadd.f32 %v37, %v38
    %s40 = vtos %v39
    %v41 = vrcp.pop 8.0
    %s42 = vtos %v41
    %s43 = smul.f32 %s40, %s42
    %p44 = scmp.lt.f32.partialorder %s43, 0.8
    %s45 = scalar_select %p44, -0.19062036, 0.19062036
    %v46 = vld [vmem:[#allocation2] sm:$0x1]
    %v47 = vstv %s45
    %v48 = vadd.f32 %v46, %v47
    %v49 = vmax.f32 %v48, -13.815511
    %v50 = vmin.f32 %v49, 0.0
    %vm51 = vcmask 253952
    %52 = vst.msk [vmem:[#allocation5] sm:$0x1] %vm51, %v50
    %v53 = vmul.f32 %v50, 0.5
    %v54 = vmul.f32 %v53, 1.442695
    %v55 = vpow.pop %v54
    %56 = vst.msk [vmem:[#allocation6] sm:$0x1] %vm51, %v55
    // Predicated region
    $region14: #{pallas_tune_logvar.1} parent=1 // pred_check
      _
    $region15: #{pallas_tune_logvar.1} parent=1 // pred_check_branch
      %58 = sbr.rel (0) target = $region17
    $region16: #{pallas_tune_logvar.1} parent=1 // pred_region
      %s60 = ssub.s32 16, 16
      %61 = vsyncadd [#allocation4], %s60
      %s63 = sshll.u32 [#allocation5], 4
      %s64 = int_to_ptr.vmem [resolvable:$true] %s63
      %66 = dma.vmem_to_hbm [thread:$0]  %s64, 16, %s2, [#allocation4]
    $region17: #{pallas_tune_logvar.1} parent=1 // pred_fallthru
      _
    // Predicated region
    $region18: #{pallas_tune_logvar.1} parent=1 // pred_check
      _
    $region19: #{pallas_tune_logvar.1} parent=1 // pred_check_branch
      %68 = sbr.rel (0) target = $region21
    $region20: #{pallas_tune_logvar.1} parent=1 // pred_region
      %s70 = ssub.s32 16, 16
      %71 = vsyncadd [#allocation7], %s70
      %s73 = sshll.u32 [#allocation6], 4
      %s74 = int_to_ptr.vmem [resolvable:$true] %s73
      %76 = dma.vmem_to_hbm [thread:$0]  %s74, 16, %s3, [#allocation7]
    $region21: #{pallas_tune_logvar.1} parent=1 // pred_fallthru
      _
    // Predicated region
    $region22: #{pallas_tune_logvar.1} parent=1 // pred_check
      _
    $region23: #{pallas_tune_logvar.1} parent=1 // pred_check_branch
      %78 = sbr.rel (0) target = $region25
    $region24: #{pallas_tune_logvar.1} parent=1 // pred_region
      %79 = dma.done [#allocation4], 16
    $region25: #{pallas_tune_logvar.1} parent=1 // pred_fallthru
      _
    // Predicated region
    $region26: #{pallas_tune_logvar.1} parent=1 // pred_check
      _
    $region27: #{pallas_tune_logvar.1} parent=1 // pred_check_branch
      %81 = sbr.rel (0) target = $region29
    $region28: #{pallas_tune_logvar.1} parent=1 // pred_region
      %82 = dma.done [#allocation7], 16
    $region29: #{pallas_tune_logvar.1} parent=1 // pred_fallthru
      _
    %83 = vsyncpa [#allocation3], 1
    %84 = vsyncpa [#allocation4], 1
    %85 = vsyncpa [#allocation7], 1

</llo_original>
